<compile_context>
chip_gen: v6e
topology: v6e:2x2x1
jax: 0.10.0
libtpu: 0.0.40
codegen_flags: <defaults>
</compile_context>

<pallas_src>
import functools

import jax
import jax.numpy as jnp
from jax.experimental import pallas as pl
from jax.experimental.pallas import tpu as pltpu


# ----------------------------------------------------------------------------
# Linear layers (hot matmuls) as row-tiled, pipelined Pallas kernels
# ----------------------------------------------------------------------------
def _linear_kernel(x_ref, w_ref, o_ref):
    o_ref[...] = jnp.dot(
        x_ref[...], w_ref[...], preferred_element_type=jnp.float32
    ).astype(o_ref.dtype)


def _linear_bias_kernel(x_ref, w_ref, b_ref, o_ref):
    acc = jnp.dot(x_ref[...], w_ref[...], preferred_element_type=jnp.float32)
    o_ref[...] = (acc + b_ref[...].astype(jnp.float32)).astype(o_ref.dtype)


def _pick_block_m(M, pref=512):
    """Largest row-tile <= pref that divides M (falls back to M)."""
    if M <= pref:
        return M
    for t in (pref, 256, 128, 64, 32, 16, 8):
        if M % t == 0:
            return t
    return M


def pallas_linear(x2d, w_t, bias=None, block_m=512):
    """x2d: [M, K], w_t: [K, N] (already transposed), bias: [N] or None."""
    M, K = x2d.shape
    _, N = w_t.shape
    tm = _pick_block_m(M, block_m)
    grid = (M // tm,)
    x_spec = pl.BlockSpec((tm, K), lambda i: (i, 0))
    w_spec = pl.BlockSpec((K, N), lambda i: (0, 0))     # weight stays resident
    o_spec = pl.BlockSpec((tm, N), lambda i: (i, 0))
    cparams = pltpu.CompilerParams(dimension_semantics=("parallel",))
    if bias is None:
        return pl.pallas_call(
            _linear_kernel,
            out_shape=jax.ShapeDtypeStruct((M, N), x2d.dtype),
            grid=grid,
            in_specs=[x_spec, w_spec],
            out_specs=o_spec,
            compiler_params=cparams,
        )(x2d, w_t)
    b_spec = pl.BlockSpec((1, N), lambda i: (0, 0))
    return pl.pallas_call(
        _linear_bias_kernel,
        out_shape=jax.ShapeDtypeStruct((M, N), x2d.dtype),
        grid=grid,
        in_specs=[x_spec, w_spec, b_spec],
        out_specs=o_spec,
        compiler_params=cparams,
    )(x2d, w_t, bias.reshape(1, N))


# ----------------------------------------------------------------------------
# Fused factorized-attention + conv relative position encoding kernel.
# One grid step == one batch; tiles are lane-dense [N, C] (all heads at once).
# ----------------------------------------------------------------------------
def _factor_att_crpe_kernel(qkv_ref, cw_ref, cb_ref, hm_ref, vm_ref, o_ref, *,
                            C, W, window):
    N = o_ref.shape[0]
    # Static column slices of the [N, 3C] qkv block (lane-aligned when C%128==0).
    q = qkv_ref[:, 0:C]
    k = qkv_ref[:, C:2 * C]
    v = qkv_ref[:, 2 * C:3 * C]

    # --- softmax of k over the token (N) axis; columns are independent so this
    #     is fully lane-parallel.  Numerics kept in f32. ---
    kf = k.astype(jnp.float32)
    m = jnp.max(kf, axis=0, keepdims=True)          # [1, C]
    e = jnp.exp(kf - m)                             # [N, C]
    s = jnp.sum(e, axis=0, keepdims=True)           # [1, C]
    k_sm = (e * (1.0 / s)).astype(v.dtype)          # back to MXU operand dtype

    # --- factorized attention, all heads in one lane-dense matmul pair.
    #     kTv_full[c', c] = sum_n k_sm[n, c'] * v[n, c]; hm_ref zeroes the
    #     cross-head entries and carries the 1/sqrt(Ch) scale, so
    #     q @ (hm * kTv_full) == scale * per-head (q_h @ (k_h^T v_h)). ---
    kTv = jax.lax.dot_general(
        k_sm, v, (((0,), (0,)), ((), ())), preferred_element_type=jnp.float32
    )                                               # [C, C]
    kTv = (kTv * hm_ref[...]).astype(q.dtype)
    factor_att = jnp.dot(q, kTv, preferred_element_type=jnp.float32)  # [N, C] f32

    # --- conv relative position encoding: depthwise window x window conv on v
    #     seen as an [H, W, C] image (same padding), then gated by q.
    #     Spatial validity masks are precomputed ([k*k, N, 1] input), shifts go
    #     through pltpu.roll (XLU), accumulation in f32. ---
    vf = v.astype(jnp.float32)
    conv = jnp.broadcast_to(cb_ref[...].astype(jnp.float32), (N, C))
    r = window // 2
    for tap in range(window * window):
        dy = tap // window - r
        dx = tap % window - r
        w_tap = cw_ref[tap:tap + 1, :].astype(jnp.float32)       # [1, C]
        if dy == 0 and dx == 0:
            conv = conv + vf * w_tap
        else:
            shift = dy * W + dx
            # shifted[n] = v[n + shift]; wrapped rows are zeroed by the mask.
            shifted = pltpu.roll(vf, (-shift) % N, axis=0)
            conv = conv + (vm_ref[tap] * shifted) * w_tap
    crpe = q.astype(jnp.float32) * conv

    o_ref[...] = (factor_att + crpe).astype(o_ref.dtype)


def factor_att_crpe(qkv, conv_w, conv_b, head_mask, valid_mask, *, C, W, window):
    """qkv: [B, N, 3C] -> out: [B, N, C] (channel = head*Ch + ch)."""
    B, N, _ = qkv.shape
    k2 = window * window
    kernel = functools.partial(_factor_att_crpe_kernel, C=C, W=W, window=window)
    return pl.pallas_call(
        kernel,
        out_shape=jax.ShapeDtypeStruct((B, N, C), qkv.dtype),
        grid=(B,),
        in_specs=[
            pl.BlockSpec((None, N, 3 * C), lambda b: (b, 0, 0)),   # qkv slab
            pl.BlockSpec((k2, C), lambda b: (0, 0)),               # conv weights
            pl.BlockSpec((1, C), lambda b: (0, 0)),                # conv bias
            pl.BlockSpec((C, C), lambda b: (0, 0)),                # scaled head mask
            pl.BlockSpec((k2, N, 1), lambda b: (0, 0, 0)),         # spatial masks
        ],
        out_specs=pl.BlockSpec((None, N, C), lambda b: (b, 0, 0)),
        compiler_params=pltpu.CompilerParams(dimension_semantics=("parallel",)),
    )(qkv, conv_w, conv_b, head_mask, valid_mask)


# ----------------------------------------------------------------------------
# Full forward (glue in plain JAX, hot paths in Pallas)
# ----------------------------------------------------------------------------
def factor_att_conv_rel_pos_enc(x, params, size, num_heads, window=3):
    B, N, C = x.shape
    H, W = size
    assert N == H * W, "class token not supported"   # TODO(synk): CoaT CLS token passthrough
    assert window % 2 == 1 and window <= min(H, W)
    Ch = C // num_heads
    scale = Ch ** (-0.5)
    k2 = window * window

    # qkv = Linear(dim, 3*dim, bias=False); kept token-major [B, N, 3C].
    qkv = pallas_linear(x.reshape(B * N, C), params["w_qkv"].T)
    qkv = qkv.reshape(B, N, 3 * C)

    # Scaled block-diagonal head mask [C, C] (folds qk-scale into kTv).
    ci = jnp.arange(C, dtype=jnp.int32)
    head_mask = jnp.where((ci[:, None] // Ch) == (ci[None, :] // Ch),
                          jnp.float32(scale), jnp.float32(0.0))

    # Depthwise conv weights [C, w, w] -> tap-major, channel-last [w*w, C].
    conv_w = params["w_conv"].reshape(C, k2).T
    conv_b = params["b_conv"].reshape(1, C)

    # Precomputed spatial validity masks [w*w, N, 1] (removes per-tap div/mod
    # from the kernel and also kills the roll wrap-around contributions).
    n_idx = jnp.arange(N, dtype=jnp.int32)
    row, col = n_idx // W, n_idx % W
    r = window // 2
    taps = []
    for tap in range(k2):
        dy, dx = tap // window - r, tap % window - r
        taps.append((row + dy >= 0) & (row + dy < H) &
                    (col + dx >= 0) & (col + dx < W))
    valid_mask = jnp.stack(taps, axis=0).astype(jnp.float32)[:, :, None]

    out = factor_att_crpe(qkv, conv_w, conv_b, head_mask, valid_mask,
                          C=C, W=W, window=window)                  # [B, N, C]

    # proj = Linear(dim, dim); proj_drop(p=0) is identity.  No transpose needed.
    out = pallas_linear(out.reshape(B * N, C), params["w_proj"].T, params["b_proj"])
    return out.reshape(B, N, C)


# ----------------------------------------------------------------------------
# Pure-JAX reference (for correctness check)
# ----------------------------------------------------------------------------
def reference(x, params, size, num_heads, window=3):
    B, N, C = x.shape
    H, W = size
    Ch = C // num_heads
    scale = Ch ** (-0.5)

    qkv = (x @ params["w_qkv"].T).reshape(B, N, 3, num_heads, Ch).transpose(2, 0, 3, 1, 4)
    q, k, v = qkv[0], qkv[1], qkv[2]
    k_sm = jax.nn.softmax(k, axis=2)
    kTv = jnp.einsum("bhnk,bhnv->bhkv", k_sm, v)
    factor_att = jnp.einsum("bhnk,bhkv->bhnv", q, kTv)

    v_img = v.transpose(0, 1, 3, 2).reshape(B, num_heads * Ch, H, W)
    conv = jax.lax.conv_general_dilated(
        v_img,
        params["w_conv"][:, None, :, :],
        window_strides=(1, 1),
        padding=((window // 2, window // 2), (window // 2, window // 2)),
        feature_group_count=num_heads * Ch,
        dimension_numbers=("NCHW", "OIHW", "NCHW"),
    ) + params["b_conv"][None, :, None, None]
    conv = conv.reshape(B, num_heads, Ch, H * W).transpose(0, 1, 3, 2)
    crpe = q * conv

    out = scale * factor_att + crpe
    out = out.transpose(0, 2, 1, 3).reshape(B, N, C)
    return out @ params["w_proj"].T + params["b_proj"]


if __name__ == "__main__":
    # Small but lane-dense shapes: C = 128 (4 heads x 32), 8x8 image, batch 2.
    B, Hs, Ws, C, nH, window = 2, 8, 8, 128, 4, 3
    N = Hs * Ws

    key = jax.random.PRNGKey(0)
    k1, k2, k3, k4, k5, k6 = jax.random.split(key, 6)
    x = jax.random.normal(k1, (B, N, C), jnp.float32)
    params = {
        "w_qkv": jax.random.normal(k2, (3 * C, C), jnp.float32) * (C ** -0.5),
        "w_proj": jax.random.normal(k3, (C, C), jnp.float32) * (C ** -0.5),
        "b_proj": jax.random.normal(k4, (C,), jnp.float32) * 0.1,
        "w_conv": jax.random.normal(k5, (C, window, window), jnp.float32) * 0.2,
        "b_conv": jax.random.normal(k6, (C,), jnp.float32) * 0.1,
    }

    out = factor_att_conv_rel_pos_enc(x, params, (Hs, Ws), nH, window)
    out = jax.block_until_ready(out)

    ref = reference(x, params, (Hs, Ws), nH, window)
    assert out.shape == (B, N, C)
    assert jnp.allclose(out, ref, rtol=5e-4, atol=5e-4), float(
        jnp.max(jnp.abs(out - ref))
    )
    print("KERNEL_OK")
</pallas_src>

<mosaic_0001>
module attributes {stable_mosaic.version = 11 : i64} {
  func.func @_linear_kernel(%arg0: i32, %arg1: memref<128x128xf32, #tpu.memory_space<vmem>>, %arg2: memref<128x384xf32, #tpu.memory_space<vmem>>, %arg3: memref<128x384xf32, #tpu.memory_space<vmem>>) attributes {dimension_semantics = [#tpu.dimension_semantics<parallel>], iteration_bounds = array<i64: 1>, scalar_prefetch = 0 : i64, scratch_operands = 0 : i64, tpu.core_type = #tpu.core_type<tc>, window_params = [{transform_indices = @transform_0, window_bounds = array<i64: 128, 128>}, {pipeline_mode = #tpu.pipeline_mode<synchronous>, transform_indices = @transform_1, window_bounds = array<i64: 128, 384>}, {transform_indices = @transform_2, window_bounds = array<i64: 128, 384>}]} {
    %c0 = arith.constant 0 : index
    %c0_0 = arith.constant 0 : index
    %0 = vector.load %arg1[%c0, %c0_0] : memref<128x128xf32, #tpu.memory_space<vmem>>, vector<128x128xf32>
    %c0_1 = arith.constant 0 : index
    %c0_2 = arith.constant 0 : index
    %1 = vector.load %arg2[%c0_1, %c0_2] : memref<128x384xf32, #tpu.memory_space<vmem>>, vector<128x384xf32>
    %cst = arith.constant dense<0.000000e+00> : vector<128x384xf32>
    %2 = tpu.matmul %0, %1, %cst {dimension_numbers = #tpu.dot_dimension_numbers<[1], [0], [0], [1], [0, 0, 1, 1], [], []>} : vector<128x128xf32>, vector<128x384xf32>, vector<128x384xf32> -> vector<128x384xf32>
    %c0_3 = arith.constant 0 : index
    %c0_4 = arith.constant 0 : index
    %3 = vector.load %arg3[%c0_3, %c0_4] : memref<128x384xf32, #tpu.memory_space<vmem>>, vector<128x384xf32>
    tpu.vector_store %arg3[%c0_3, %c0_4], %2 {strides = array<i32>} : memref<128x384xf32, #tpu.memory_space<vmem>>, vector<128x384xf32>,
    return
  }
  func.func @transform_0(%arg0: i32) -> (i32, i32) {
    %c0_i32 = arith.constant 0 : i32
    %c0_i32_0 = arith.constant 0 : i32
    return %arg0, %c0_i32 : i32, i32
  }
  func.func @transform_1(%arg0: i32) -> (i32, i32) {
    %c0_i32 = arith.constant 0 : i32
    %c0_i32_0 = arith.constant 0 : i32
    %c0_i32_1 = arith.constant 0 : i32
    return %c0_i32, %c0_i32_0 : i32, i32
  }
  func.func @transform_2(%arg0: i32) -> (i32, i32) {
    %c0_i32 = arith.constant 0 : i32
    %c0_i32_0 = arith.constant 0 : i32
    return %arg0, %c0_i32 : i32, i32
  }
}

</mosaic_0001>

<llo_original>
// kernel: tpu_custom_call.1
$region0: #{tpu_custom_call.1}
  #allocation0 [shape = 'u32[]', space=smem, size = 0x4, offset = 0x4, fixed_abs, tag = 'smem constant byte address 0x4 - core index']
  #allocation1 [shape = 'u32[144,128]{1,0:T(1,128)}', space=vmem, size = 0x12000, scoped, tag = 'internal scratch']
  %s0 = inlined_call_operand.hbm [shape: f32[128,128], index: 0, kind: input, shape index: {}]
  %s1 = inlined_call_operand.hbm [shape: f32[128,384], index: 1, kind: input, shape index: {}]
  %s2 = inlined_call_operand.hbm [shape: f32[128,384], index: 2, kind: output, shape index: {}]
  %s3 = sld [smem:[#allocation0]]
  $region26: #{tpu_custom_call.1} parent=0
    _
  %s5 = ssub.s32 1, %s3
  %s6 = scalar_select 0, %s5, %s3
  $region1: #{tpu_custom_call.1} parent=0
    #allocation2 [shape = 'u8[65536]{0}', space=vmem, size = 0x10000, scoped, tag = 'input window, operand 0, single buffered']
    #allocation3 [shape = 's32[1]{0}', space=sflag, size = 0x4, scoped, tag = 'scoped memory for tpu_custom_call.1']
    #allocation4 [shape = 's32[1]{0}', space=sflag, size = 0x4, scoped, tag = 'scoped memory for tpu_custom_call.1']
    #allocation5 [shape = 'u8[196608]{0}', space=vmem, size = 0x30000, scoped, tag = 'input window, operand 1, single buffered']
    #allocation6 [shape = 's32[1]{0}', space=sflag, size = 0x4, scoped, tag = 'scoped memory for tpu_custom_call.1']
    #allocation7 [shape = 'u8[196608]{0}', space=vmem, size = 0x30000, scoped, tag = 'output window, operand 0, single buffered']
    %7 = vsyncpa [#allocation3], 0
    %8 = vsyncpa [#allocation6], 0
    %9 = vsyncpa [#allocation4], 0
    // Predicated region
    $region2: #{tpu_custom_call.1} parent=1 // pred_check
      _
    $region3: #{tpu_custom_call.1} parent=1 // pred_check_branch
      %11 = sbr.rel (0) target = $region5
    $region4: #{tpu_custom_call.1} parent=1 // pred_region
      %s13 = ssub.s32 2048, 2048
      %14 = vsyncadd [#allocation3], %s13
      %s15 = sshll.u32 [#allocation2], 4
      %s16 = int_to_ptr.vmem [resolvable:$true] %s15
      %21 = dma.hbm_to_vmem [thread:$0]  %s0, 2048, %s16, [#allocation3], 128, 128, 8
    $region5: #{tpu_custom_call.1} parent=1 // pred_fallthru
      _
    // Predicated region
    $region6: #{tpu_custom_call.1} parent=1 // pred_check
      _
    $region7: #{tpu_custom_call.1} parent=1 // pred_check_branch
      %23 = sbr.rel (0) target = $region9
    $region8: #{tpu_custom_call.1} parent=1 // pred_region
      %s25 = ssub.s32 6144, 6144
      %26 = vsyncadd [#allocation6], %s25
      %s27 = sshll.u32 [#allocation5], 4
      %s28 = int_to_ptr.vmem [resolvable:$true] %s27
      %33 = dma.hbm_to_vmem [thread:$0]  %s1, 6144, %s28, [#allocation6], 384, 384, 24
    $region9: #{tpu_custom_call.1} parent=1 // pred_fallthru
      _
    // Predicated region
    $region10: #{tpu_custom_call.1} parent=1 // pred_check
      _
    $region11: #{tpu_custom_call.1} parent=1 // pred_check_branch
      %35 = sbr.rel (0) target = $region13
    $region12: #{tpu_custom_call.1} parent=1 // pred_region
      %36 = dma.done [#allocation3], 2048
    $region13: #{tpu_custom_call.1} parent=1 // pred_fallthru
      _
    // Predicated region
    $region14: #{tpu_custom_call.1} parent=1 // pred_check
      _
    $region15: #{tpu_custom_call.1} parent=1 // pred_check_branch
      %38 = sbr.rel (0) target = $region17
    $region16: #{tpu_custom_call.1} parent=1 // pred_region
      %39 = dma.done [#allocation6], 6144
    $region17: #{tpu_custom_call.1} parent=1 // pred_fallthru
      _
    %v40 = vld [vmem:[#allocation2] sm:$0xff]
    %v41 = vld [vmem:[#allocation2 + $0x8] sm:$0xff]
    %v42 = vld [vmem:[#allocation2 + $0x10] sm:$0xff]
    %v43 = vld [vmem:[#allocation2 + $0x18] sm:$0xff]
    %v44 = vld [vmem:[#allocation2 + $0x20] sm:$0xff]
    %v45 = vld [vmem:[#allocation2 + $0x28] sm:$0xff]
    %v46 = vld [vmem:[#allocation2 + $0x30] sm:$0xff]
    %v47 = vld [vmem:[#allocation2 + $0x38] sm:$0xff]
    %v48 = vld [vmem:[#allocation2 + $0x40] sm:$0xff]
    %v49 = vld [vmem:[#allocation2 + $0x48] sm:$0xff]
    %v50 = vld [vmem:[#allocation2 + $0x50] sm:$0xff]
    %v51 = vld [vmem:[#allocation2 + $0x58] sm:$0xff]
    %v52 = vld [vmem:[#allocation2 + $0x60] sm:$0xff]
    %v53 = vld [vmem:[#allocation2 + $0x68] sm:$0xff]
    %v54 = vld [vmem:[#allocation2 + $0x70] sm:$0xff]
    %v55 = vld [vmem:[#allocation2 + $0x78] sm:$0xff]
    %v56 = vld [vmem:[#allocation5] sm:$0xff]
    %v57 = vld [vmem:[#allocation5 + $0x8] sm:$0xff]
    %v58 = vld [vmem:[#allocation5 + $0x10] sm:$0xff]
    %v59 = vld [vmem:[#allocation5 + $0x18] sm:$0xff]
    %v60 = vld [vmem:[#allocation5 + $0x20] sm:$0xff]
    %v61 = vld [vmem:[#allocation5 + $0x28] sm:$0xff]
    %v62 = vld [vmem:[#allocation5 + $0x30] sm:$0xff]
    %v63 = vld [vmem:[#allocation5 + $0x38] sm:$0xff]
    %v64 = vld [vmem:[#allocation5 + $0x40] sm:$0xff]
    %v65 = vld [vmem:[#allocation5 + $0x48] sm:$0xff]
    %v66 = vld [vmem:[#allocation5 + $0x50] sm:$0xff]
    %v67 = vld [vmem:[#allocation5 + $0x58] sm:$0xff]
    %v68 = vld [vmem:[#allocation5 + $0x60] sm:$0xff]
    %v69 = vld [vmem:[#allocation5 + $0x68] sm:$0xff]
    %v70 = vld [vmem:[#allocation5 + $0x70] sm:$0xff]
    %v71 = vld [vmem:[#allocation5 + $0x78] sm:$0xff]
    %v72 = vld [vmem:[#allocation5 + $0x80] sm:$0xff]
    %v73 = vld [vmem:[#allocation5 + $0x88] sm:$0xff]
    %v74 = vld [vmem:[#allocation5 + $0x90] sm:$0xff]
    %v75 = vld [vmem:[#allocation5 + $0x98] sm:$0xff]
    %v76 = vld [vmem:[#allocation5 + $0xa0] sm:$0xff]
    %v77 = vld [vmem:[#allocation5 + $0xa8] sm:$0xff]
    %v78 = vld [vmem:[#allocation5 + $0xb0] sm:$0xff]
    %v79 = vld [vmem:[#allocation5 + $0xb8] sm:$0xff]
    %v80 = vld [vmem:[#allocation5 + $0xc0] sm:$0xff]
    %v81 = vld [vmem:[#allocation5 + $0xc8] sm:$0xff]
    %v82 = vld [vmem:[#allocation5 + $0xd0] sm:$0xff]
    %v83 = vld [vmem:[#allocation5 + $0xd8] sm:$0xff]
    %v84 = vld [vmem:[#allocation5 + $0xe0] sm:$0xff]
    %v85 = vld [vmem:[#allocation5 + $0xe8] sm:$0xff]
    %v86 = vld [vmem:[#allocation5 + $0xf0] sm:$0xff]
    %v87 = vld [vmem:[#allocation5 + $0xf8] sm:$0xff]
    %v88 = vld [vmem:[#allocation5 + $0x100] sm:$0xff]
    %v89 = vld [vmem:[#allocation5 + $0x108] sm:$0xff]
    %v90 = vld [vmem:[#allocation5 + $0x110] sm:$0xff]
    %v91 = vld [vmem:[#allocation5 + $0x118] sm:$0xff]
    %v92 = vld [vmem:[#allocation5 + $0x120] sm:$0xff]
    %v93 = vld [vmem:[#allocation5 + $0x128] sm:$0xff]
    %v94 = vld [vmem:[#allocation5 + $0x130] sm:$0xff]
    %v95 = vld [vmem:[#allocation5 + $0x138] sm:$0xff]
    %v96 = vld [vmem:[#allocation5 + $0x140] sm:$0xff]
    %v97 = vld [vmem:[#allocation5 + $0x148] sm:$0xff]
    %v98 = vld [vmem:[#allocation5 + $0x150] sm:$0xff]
    %v99 = vld [vmem:[#allocation5 + $0x158] sm:$0xff]
    %v100 = vld [vmem:[#allocation5 + $0x160] sm:$0xff]
    %v101 = vld [vmem:[#allocation5 + $0x168] sm:$0xff]
    %v102 = vld [vmem:[#allocation5 + $0x170] sm:$0xff]
    %v103 = vld [vmem:[#allocation5 + $0x178] sm:$0xff]
    %104 = vmatprep.subr.mxu0 %v102
    %105 = vmatpush1.msra.mxu0 %v101
    %106 = vmatprep.subr.mxu0 %v99
    %107 = vmatpush1.msra.mxu0 %v98
    %108 = vmatprep.subr.mxu0 %v96
    %109 = vmatpush1.msra.mxu0 %v95
    %110 = vmatprep.subr.mxu0 %v93
    %111 = vmatpush1.msra.mxu0 %v92
    %112 = vmatprep.subr.mxu0 %v90
    %113 = vmatpush1.msra.mxu0 %v89
    %114 = vmatprep.subr.mxu0 %v87
    %115 = vmatpush1.msra.mxu0 %v86
    %116 = vmatprep.subr.mxu0 %v84
    %117 = vmatpush1.msra.mxu0 %v83
    %118 = vmatprep.subr.mxu0 %v81
    %119 = vmatpush1.msra.mxu0 %v80
    %120 = vmatprep.subr.mxu0 %v78
    %121 = vmatpush1.msra.mxu0 %v77
    %122 = vmatprep.subr.mxu0 %v75
    %123 = vmatpush1.msra.mxu0 %v74
    %124 = vmatprep.subr.mxu0 %v72
    %125 = vmatpush1.msra.mxu0 %v71
    %126 = vmatprep.subr.mxu0 %v69
    %127 = vmatpush1.msra.mxu0 %v68
    %128 = vmatprep.subr.mxu0 %v66
    %129 = vmatpush1.msra.mxu0 %v65
    %130 = vmatprep.subr.mxu0 %v63
    %131 = vmatpush1.msra.mxu0 %v62
    %132 = vmatprep.subr.mxu0 %v60
    %133 = vmatpush1.msra.mxu0 %v59
    %134 = vmatprep.subr.mxu0 %v57
    %135 = vmatpush1.msra.mxu0 %v56
    %136 = vmatprep.subr.mxu0 0.0
    %137 = vmatpush2.msra.mxu0 0.0
    %138 = vmatprep.subr.mxu0 0.0
    %139 = vmatpush2.msra.mxu0 0.0
    %140 = vmatprep.subr.mxu0 0.0
    %141 = vmatpush2.msra.mxu0 0.0
    %142 = vmatprep.subr.mxu0 0.0
    %143 = vmatpush2.msra.mxu0 0.0
    %144 = vmatprep.subr.mxu0 0.0
    %145 = vmatpush2.msra.mxu0 0.0
    %146 = vmatprep.subr.mxu0 0.0
    %147 = vmatpush2.msra.mxu0 0.0
    %148 = vmatprep.subr.mxu0 0.0
    %149 = vmatpush2.msra.mxu0 0.0
    %150 = vmatprep.subr.mxu0 0.0
    %151 = vmatpush2.msra.mxu0 0.0
    %152 = vmatprep.subr.mxu0 0.0
    %153 = vmatpush2.msra.mxu0 0.0
    %154 = vmatprep.subr.mxu0 0.0
    %155 = vmatpush2.msra.mxu0 0.0
    %156 = vmatprep.subr.mxu0 0.0
    %157 = vmatpush2.msra.mxu0 0.0
    %158 = vmatprep.subr.mxu0 0.0
    %159 = vmatpush2.msra.mxu0 0.0
    %160 = vmatprep.subr.mxu0 0.0
    %161 = vmatpush2.msra.mxu0 0.0
    %162 = vmatprep.subr.mxu0 0.0
    %163 = vmatpush2.msra.mxu0 0.0
    %164 = vmatprep.subr.mxu0 0.0
    %165 = vmatpush2.msra.mxu0 0.0
    %166 = vmatprep.subr.mxu0 0.0
    %167 = vmatpush2.msra.mxu0 0.0
    %168 = vmatprep.mubr.f32.mxu0 0.0
    %169 = vmatmul.mubr.f32.gmra.mxu0 %v40
    %v170 = vpop.f32.mrf.mxu0
    %v171 = vadd.f32 0.0, %v170
    %v172 = vpop.f32.mrf.mxu0
    %v173 = vadd.f32 0.0, %v172
    %174 = vmatprep.mubr.f32.mxu0 0.0
    %175 = vmatmul.mubr.f32.gmra.mxu0 %v41
    %v176 = vpop.f32.mrf.mxu0
    %v177 = vadd.f32 0.0, %v176
    %v178 = vpop.f32.mrf.mxu0
    %v179 = vadd.f32 0.0, %v178
    %180 = vmatprep.mubr.f32.mxu0 0.0
    %181 = vmatmul.mubr.f32.gmra.mxu0 %v42
    %v182 = vpop.f32.mrf.mxu0
    %v183 = vadd.f32 0.0, %v182
    %v184 = vpop.f32.mrf.mxu0
    %v185 = vadd.f32 0.0, %v184
    %186 = vmatprep.mubr.f32.mxu0 0.0
    %187 = vmatmul.mubr.f32.gmra.mxu0 %v43
    %v188 = vpop.f32.mrf.mxu0
    %v189 = vadd.f32 0.0, %v188
    %v190 = vpop.f32.mrf.mxu0
    %v191 = vadd.f32 0.0, %v190
    %192 = vmatprep.mubr.f32.mxu0 0.0
    %193 = vmatmul.mubr.f32.gmra.mxu0 %v44
    %v194 = vpop.f32.mrf.mxu0
    %v195 = vadd.f32 0.0, %v194
    %v196 = vpop.f32.mrf.mxu0
    %v197 = vadd.f32 0.0, %v196
    %198 = vmatprep.mubr.f32.mxu0 0.0
    %199 = vmatmul.mubr.f32.gmra.mxu0 %v45
    %v200 = vpop.f32.mrf.mxu0
    %v201 = vadd.f32 0.0, %v200
    %v202 = vpop.f32.mrf.mxu0
    %v203 = vadd.f32 0.0, %v202
    %204 = vmatprep.mubr.f32.mxu0 0.0
    %205 = vmatmul.mubr.f32.gmra.mxu0 %v46
    %v206 = vpop.f32.mrf.mxu0
    %v207 = vadd.f32 0.0, %v206
    %v208 = vpop.f32.mrf.mxu0
    %v209 = vadd.f32 0.0, %v208
    %210 = vmatprep.mubr.f32.mxu0 0.0
    %211 = vmatmul.mubr.f32.gmra.mxu0 %v47
    %v212 = vpop.f32.mrf.mxu0
    %v213 = vadd.f32 0.0, %v212
    %v214 = vpop.f32.mrf.mxu0
    %v215 = vadd.f32 0.0, %v214
    %216 = vmatprep.mubr.f32.mxu0 0.0
    %217 = vmatmul.mubr.f32.gmra.mxu0 %v48
    %v218 = vpop.f32.mrf.mxu0
    %v219 = vadd.f32 0.0, %v218
    %v220 = vpop.f32.mrf.mxu0
    %v221 = vadd.f32 0.0, %v220
    %222 = vmatprep.mubr.f32.mxu0 0.0
    %223 = vmatmul.mubr.f32.gmra.mxu0 %v49
    %v224 = vpop.f32.mrf.mxu0
    %v225 = vadd.f32 0.0, %v224
    %v226 = vpop.f32.mrf.mxu0
    %v227 = vadd.f32 0.0, %v226
    %228 = vmatprep.mubr.f32.mxu0 0.0
    %229 = vmatmul.mubr.f32.gmra.mxu0 %v50
    %v230 = vpop.f32.mrf.mxu0
    %v231 = vadd.f32 0.0, %v230
    %v232 = vpop.f32.mrf.mxu0
    %v233 = vadd.f32 0.0, %v232
    %234 = vmatprep.mubr.f32.mxu0 0.0
    %235 = vmatmul.mubr.f32.gmra.mxu0 %v51
    %v236 = vpop.f32.mrf.mxu0
    %v237 = vadd.f32 0.0, %v236
    %v238 = vpop.f32.mrf.mxu0
    %v239 = vadd.f32 0.0, %v238
    %240 = vmatprep.mubr.f32.mxu0 0.0
    %241 = vmatmul.mubr.f32.gmra.mxu0 %v52
    %v242 = vpop.f32.mrf.mxu0
    %v243 = vadd.f32 0.0, %v242
    %v244 = vpop.f32.mrf.mxu0
    %v245 = vadd.f32 0.0, %v244
    %246 = vmatprep.mubr.f32.mxu0 0.0
    %247 = vmatmul.mubr.f32.gmra.mxu0 %v53
    %v248 = vpop.f32.mrf.mxu0
    %v249 = vadd.f32 0.0, %v248
    %v250 = vpop.f32.mrf.mxu0
    %v251 = vadd.f32 0.0, %v250
    %252 = vmatprep.mubr.f32.mxu0 0.0
    %253 = vmatmul.mubr.f32.gmra.mxu0 %v54
    %v254 = vpop.f32.mrf.mxu0
    %v255 = vadd.f32 0.0, %v254
    %v256 = vpop.f32.mrf.mxu0
    %v257 = vadd.f32 0.0, %v256
    %258 = vmatprep.mubr.f32.mxu0 0.0
    %259 = vmatmul.mubr.f32.gmra.mxu0 %v55
    %v260 = vpop.f32.mrf.mxu0
    %v261 = vadd.f32 0.0, %v260
    %v262 = vpop.f32.mrf.mxu0
    %v263 = vadd.f32 0.0, %v262
    %264 = vdwg.mxu0
    %265 = vmatprep.subr.mxu0 0.0
    %266 = vmatpush1.msra.mxu0 %v103
    %267 = vmatprep.subr.mxu0 0.0
    %268 = vmatpush1.msra.mxu0 %v100
    %269 = vmatprep.subr.mxu0 0.0
    %270 = vmatpush1.msra.mxu0 %v97
    %271 = vmatprep.subr.mxu0 0.0
    %272 = vmatpush1.msra.mxu0 %v94
    %273 = vmatprep.subr.mxu0 0.0
    %274 = vmatpush1.msra.mxu0 %v91
    %275 = vmatprep.subr.mxu0 0.0
    %276 = vmatpush1.msra.mxu0 %v88
    %277 = vmatprep.subr.mxu0 0.0
    %278 = vmatpush1.msra.mxu0 %v85
    %279 = vmatprep.subr.mxu0 0.0
    %280 = vmatpush1.msra.mxu0 %v82
    %281 = vmatprep.subr.mxu0 0.0
    %282 = vmatpush1.msra.mxu0 %v79
    %283 = vmatprep.subr.mxu0 0.0
    %284 = vmatpush1.msra.mxu0 %v76
    %285 = vmatprep.subr.mxu0 0.0
    %286 = vmatpush1.msra.mxu0 %v73
    %287 = vmatprep.subr.mxu0 0.0
    %288 = vmatpush1.msra.mxu0 %v70
    %289 = vmatprep.subr.mxu0 0.0
    %290 = vmatpush1.msra.mxu0 %v67
    %291 = vmatprep.subr.mxu0 0.0
    %292 = vmatpush1.msra.mxu0 %v64
    %293 = vmatprep.subr.mxu0 0.0
    %294 = vmatpush1.msra.mxu0 %v61
    %295 = vmatprep.subr.mxu0 0.0
    %296 = vmatpush1.msra.mxu0 %v58
    %297 = vmatprep.subr.mxu0 0.0
    %298 = vmatpush2.msra.mxu0 0.0
    %299 = vmatprep.subr.mxu0 0.0
    %300 = vmatpush2.msra.mxu0 0.0
    %301 = vmatprep.subr.mxu0 0.0
    %302 = vmatpush2.msra.mxu0 0.0
    %303 = vmatprep.subr.mxu0 0.0
    %304 = vmatpush2.msra.mxu0 0.0
    %305 = vmatprep.subr.mxu0 0.0
    %306 = vmatpush2.msra.mxu0 0.0
    %307 = vmatprep.subr.mxu0 0.0
    %308 = vmatpush2.msra.mxu0 0.0
    %309 = vmatprep.subr.mxu0 0.0
    %310 = vmatpush2.msra.mxu0 0.0
    %311 = vmatprep.subr.mxu0 0.0
    %312 = vmatpush2.msra.mxu0 0.0
    %313 = vmatprep.subr.mxu0 0.0
    %314 = vmatpush2.msra.mxu0 0.0
    %315 = vmatprep.subr.mxu0 0.0
    %316 = vmatpush2.msra.mxu0 0.0
    %317 = vmatprep.subr.mxu0 0.0
    %318 = vmatpush2.msra.mxu0 0.0
    %319 = vmatprep.subr.mxu0 0.0
    %320 = vmatpush2.msra.mxu0 0.0
    %321 = vmatprep.subr.mxu0 0.0
    %322 = vmatpush2.msra.mxu0 0.0
    %323 = vmatprep.subr.mxu0 0.0
    %324 = vmatpush2.msra.mxu0 0.0
    %325 = vmatprep.subr.mxu0 0.0
    %326 = vmatpush2.msra.mxu0 0.0
    %327 = vmatprep.subr.mxu0 0.0
    %328 = vmatpush2.msra.mxu0 0.0
    %329 = vmatprep.mubr.f32.mxu0 0.0
    %330 = vmatmul.mubr.f32.gmra.mxu0 %v40
    %v331 = vpop.f32.mrf.mxu0
    %v332 = vadd.f32 0.0, %v331
    %v333 = vpop.f32.mrf.mxu0
    %334 = vmatprep.mubr.f32.mxu0 0.0
    %335 = vmatmul.mubr.f32.gmra.mxu0 %v41
    %v336 = vpop.f32.mrf.mxu0
    %v337 = vadd.f32 0.0, %v336
    %v338 = vpop.f32.mrf.mxu0
    %339 = vmatprep.mubr.f32.mxu0 0.0
    %340 = vmatmul.mubr.f32.gmra.mxu0 %v42
    %v341 = vpop.f32.mrf.mxu0
    %v342 = vadd.f32 0.0, %v341
    %v343 = vpop.f32.mrf.mxu0
    %344 = vmatprep.mubr.f32.mxu0 0.0
    %345 = vmatmul.mubr.f32.gmra.mxu0 %v43
    %v346 = vpop.f32.mrf.mxu0
    %v347 = vadd.f32 0.0, %v346
    %v348 = vpop.f32.mrf.mxu0
    %349 = vmatprep.mubr.f32.mxu0 0.0
    %350 = vmatmul.mubr.f32.gmra.mxu0 %v44
    %v351 = vpop.f32.mrf.mxu0
    %v352 = vadd.f32 0.0, %v351
    %v353 = vpop.f32.mrf.mxu0
    %354 = vmatprep.mubr.f32.mxu0 0.0
    %355 = vmatmul.mubr.f32.gmra.mxu0 %v45
    %v356 = vpop.f32.mrf.mxu0
    %v357 = vadd.f32 0.0, %v356
    %v358 = vpop.f32.mrf.mxu0
    %359 = vmatprep.mubr.f32.mxu0 0.0
    %360 = vmatmul.mubr.f32.gmra.mxu0 %v46
    %v361 = vpop.f32.mrf.mxu0
    %v362 = vadd.f32 0.0, %v361
    %v363 = vpop.f32.mrf.mxu0
    %364 = vmatprep.mubr.f32.mxu0 0.0
    %365 = vmatmul.mubr.f32.gmra.mxu0 %v47
    %v366 = vpop.f32.mrf.mxu0
    %v367 = vadd.f32 0.0, %v366
    %v368 = vpop.f32.mrf.mxu0
    %369 = vmatprep.mubr.f32.mxu0 0.0
    %370 = vmatmul.mubr.f32.gmra.mxu0 %v48
    %v371 = vpop.f32.mrf.mxu0
    %v372 = vadd.f32 0.0, %v371
    %v373 = vpop.f32.mrf.mxu0
    %374 = vmatprep.mubr.f32.mxu0 0.0
    %375 = vmatmul.mubr.f32.gmra.mxu0 %v49
    %v376 = vpop.f32.mrf.mxu0
    %v377 = vadd.f32 0.0, %v376
    %v378 = vpop.f32.mrf.mxu0
    %379 = vmatprep.mubr.f32.mxu0 0.0
    %380 = vmatmul.mubr.f32.gmra.mxu0 %v50
    %v381 = vpop.f32.mrf.mxu0
    %v382 = vadd.f32 0.0, %v381
    %v383 = vpop.f32.mrf.mxu0
    %384 = vmatprep.mubr.f32.mxu0 0.0
    %385 = vmatmul.mubr.f32.gmra.mxu0 %v51
    %v386 = vpop.f32.mrf.mxu0
    %v387 = vadd.f32 0.0, %v386
    %v388 = vpop.f32.mrf.mxu0
    %389 = vmatprep.mubr.f32.mxu0 0.0
    %390 = vmatmul.mubr.f32.gmra.mxu0 %v52
    %v391 = vpop.f32.mrf.mxu0
    %v392 = vadd.f32 0.0, %v391
    %v393 = vpop.f32.mrf.mxu0
    %394 = vmatprep.mubr.f32.mxu0 0.0
    %395 = vmatmul.mubr.f32.gmra.mxu0 %v53
    %v396 = vpop.f32.mrf.mxu0
    %v397 = vadd.f32 0.0, %v396
    %v398 = vpop.f32.mrf.mxu0
    %399 = vmatprep.mubr.f32.mxu0 0.0
    %400 = vmatmul.mubr.f32.gmra.mxu0 %v54
    %v401 = vpop.f32.mrf.mxu0
    %v402 = vadd.f32 0.0, %v401
    %v403 = vpop.f32.mrf.mxu0
    %404 = vmatprep.mubr.f32.mxu0 0.0
    %405 = vmatmul.mubr.f32.gmra.mxu0 %v55
    %v406 = vpop.f32.mrf.mxu0
    %v407 = vadd.f32 0.0, %v406
    %v408 = vpop.f32.mrf.mxu0
    %409 = vdwg.mxu0
    %410 = vst [vmem:[#allocation7] sm:$0xff] %v171
    %411 = vst [vmem:[#allocation7 + $0x8] sm:$0xff] %v173
    %412 = vst [vmem:[#allocation7 + $0x10] sm:$0xff] %v332
    %413 = vst [vmem:[#allocation7 + $0x18] sm:$0xff] %v177
    %414 = vst [vmem:[#allocation7 + $0x20] sm:$0xff] %v179
    %415 = vst [vmem:[#allocation7 + $0x28] sm:$0xff] %v337
    %416 = vst [vmem:[#allocation7 + $0x30] sm:$0xff] %v183
    %417 = vst [vmem:[#allocation7 + $0x38] sm:$0xff] %v185
    %418 = vst [vmem:[#allocation7 + $0x40] sm:$0xff] %v342
    %419 = vst [vmem:[#allocation7 + $0x48] sm:$0xff] %v189
    %420 = vst [vmem:[#allocation7 + $0x50] sm:$0xff] %v191
    %421 = vst [vmem:[#allocation7 + $0x58] sm:$0xff] %v347
    %422 = vst [vmem:[#allocation7 + $0x60] sm:$0xff] %v195
    %423 = vst [vmem:[#allocation7 + $0x68] sm:$0xff] %v197
    %424 = vst [vmem:[#allocation7 + $0x70] sm:$0xff] %v352
    %425 = vst [vmem:[#allocation7 + $0x78] sm:$0xff] %v201
    %426 = vst [vmem:[#allocation7 + $0x80] sm:$0xff] %v203
    %427 = vst [vmem:[#allocation7 + $0x88] sm:$0xff] %v357
    %428 = vst [vmem:[#allocation7 + $0x90] sm:$0xff] %v207
    %429 = vst [vmem:[#allocation7 + $0x98] sm:$0xff] %v209
    %430 = vst [vmem:[#allocation7 + $0xa0] sm:$0xff] %v362
    %431 = vst [vmem:[#allocation7 + $0xa8] sm:$0xff] %v213
    %432 = vst [vmem:[#allocation7 + $0xb0] sm:$0xff] %v215
    %433 = vst [vmem:[#allocation7 + $0xb8] sm:$0xff] %v367
    %434 = vst [vmem:[#allocation7 + $0xc0] sm:$0xff] %v219
    %435 = vst [vmem:[#allocation7 + $0xc8] sm:$0xff] %v221
    %436 = vst [vmem:[#allocation7 + $0xd0] sm:$0xff] %v372
    %437 = vst [vmem:[#allocation7 + $0xd8] sm:$0xff] %v225
    %438 = vst [vmem:[#allocation7 + $0xe0] sm:$0xff] %v227
    %439 = vst [vmem:[#allocation7 + $0xe8] sm:$0xff] %v377
    %440 = vst [vmem:[#allocation7 + $0xf0] sm:$0xff] %v231
    %441 = vst [vmem:[#allocation7 + $0xf8] sm:$0xff] %v233
    %442 = vst [vmem:[#allocation7 + $0x100] sm:$0xff] %v382
    %443 = vst [vmem:[#allocation7 + $0x108] sm:$0xff] %v237
    %444 = vst [vmem:[#allocation7 + $0x110] sm:$0xff] %v239
    %445 = vst [vmem:[#allocation7 + $0x118] sm:$0xff] %v387
    %446 = vst [vmem:[#allocation7 + $0x120] sm:$0xff] %v243
    %447 = vst [vmem:[#allocation7 + $0x128] sm:$0xff] %v245
    %448 = vst [vmem:[#allocation7 + $0x130] sm:$0xff] %v392
    %449 = vst [vmem:[#allocation7 + $0x138] sm:$0xff] %v249
    %450 = vst [vmem:[#allocation7 + $0x140] sm:$0xff] %v251
    %451 = vst [vmem:[#allocation7 + $0x148] sm:$0xff] %v397
    %452 = vst [vmem:[#allocation7 + $0x150] sm:$0xff] %v255
    %453 = vst [vmem:[#allocation7 + $0x158] sm:$0xff] %v257
    %454 = vst [vmem:[#allocation7 + $0x160] sm:$0xff] %v402
    %455 = vst [vmem:[#allocation7 + $0x168] sm:$0xff] %v261
    %456 = vst [vmem:[#allocation7 + $0x170] sm:$0xff] %v263
    %457 = vst [vmem:[#allocation7 + $0x178] sm:$0xff] %v407
    // Predicated region
    $region18: #{tpu_custom_call.1} parent=1 // pred_check
      _
    $region19: #{tpu_custom_call.1} parent=1 // pred_check_branch
      %459 = sbr.rel (0) target = $region21
    $region20: #{tpu_custom_call.1} parent=1 // pred_region
      %s461 = ssub.s32 6144, 6144
      %462 = vsyncadd [#allocation4], %s461
      %s463 = sshll.u32 [#allocation7], 4
      %s464 = int_to_ptr.vmem [resolvable:$true] %s463
      %469 = dma.vmem_to_hbm [thread:$0]  %s464, 6144, %s2, [#allocation4], 384, 384, 24
    $region21: #{tpu_custom_call.1} parent=1 // pred_fallthru
      _
    // Predicated region
    $region22: #{tpu_custom_call.1} parent=1 // pred_check
      _
    $region23: #{tpu_custom_call.1} parent=1 // pred_check_branch
      %471 = sbr.rel (0) target = $region25
    $region24: #{tpu_custom_call.1} parent=1 // pred_region
      %472 = dma.done [#allocation4], 6144
    $region25: #{tpu_custom_call.1} parent=1 // pred_fallthru
      _
    %473 = vsyncpa [#allocation3], 1
    %474 = vsyncpa [#allocation6], 1
    %475 = vsyncpa [#allocation4], 1

</llo_original>
